<compile_context>
chip_gen: v6e
topology: v6e:2x2x1
jax: 0.10.0
libtpu: 0.0.40
codegen_flags: <defaults>
</compile_context>

<pallas_src>
import functools

import jax
import jax.numpy as jnp
from jax.experimental import pallas as pl
from jax.experimental.pallas import tpu as pltpu


def _softplus(z):
    # Matches torch.nn.Softplus(beta=1, threshold=20):
    #   softplus(x) = log(1 + exp(x)) for x <= 20, else x
    return jnp.where(z > 20.0, z, jnp.log1p(jnp.exp(jnp.minimum(z, 20.0))))


def _round_up(x, m):
    return ((x + m - 1) // m) * m


def c_critic_kernel(x_ref, w1_ref, b1_ref, w2_ref, b2_ref, w3_ref, b3_ref, o_ref):
    """Fused 3-layer MLP on one feature-major batch tile.

    x_ref : [D, tile]   (f32, batch on the lane axis)
    w1_ref: [H1, D]     b1_ref: [H1, 1]
    w2_ref: [H2, H1]    b2_ref: [H2, 1]
    w3_ref: [1, H2]     b3_ref: [1, 1]  (SMEM scalar)
    o_ref : [1, tile]   (lane-dense output row, f32)
    """
    x = x_ref[...]

    # Layer 1: [H1, D] @ [D, tile] -> [H1, tile]; ReLU on the VPU.
    h1 = jnp.dot(w1_ref[...], x, preferred_element_type=jnp.float32) + b1_ref[...]
    h1 = jnp.maximum(h1, 0.0)

    # Layer 2: [H2, H1] @ [H1, tile] -> [H2, tile].
    h2 = jnp.dot(w2_ref[...], h1, preferred_element_type=jnp.float32) + b2_ref[...]
    h2 = jnp.maximum(h2, 0.0)

    # Layer 3 (out_features = 1): [1, H2] @ [H2, tile] -> lane-dense [1, tile].
    z = jnp.dot(w3_ref[...], h2, preferred_element_type=jnp.float32) + b3_ref[0, 0]

    o_ref[...] = _softplus(z).astype(o_ref.dtype)   # Softplus (output_activation)


@functools.partial(jax.jit, static_argnames=("tile_b",))
def c_critic_forward(obs_act, params, *, tile_b=8192):
    """C_Critic.forward: squeeze(softplus(MLP(obs_act)), -1).

    obs_act: [B, obs_dim + act_dim] float32. Returns [B] float32.
    Weights are in torch layout: w_i is [out_features, in_features], b_i is [out].
    """
    w1, b1, w2, b2, w3, b3 = params
    B, D = obs_act.shape
    H1 = w1.shape[0]
    H2 = w2.shape[0]

    # Batch tile: lane-aligned (multiple of 128), capped so the grid has >= 2
    # steps whenever B allows it (lets v7x shard across its 2 TensorCores).
    # For tiny batches (< 128 lanes) use the full batch as a single block
    # (block dim == full array dim is always legal).
    if B < 128:
        tile = B
    else:
        tile = min(_round_up(tile_b, 128),
                   max(128, _round_up(-(-B // 2), 128)))
    grid = (pl.cdiv(B, tile),)

    # Feature-major view: batch on the lane axis. D is tiny (obs+act dims),
    # so this transpose is a cheap relayout compared to the padded row-major
    # intermediates it removes inside the kernel.
    x_t = obs_act.T                              # [D, B]

    b1c = b1.reshape(H1, 1).astype(jnp.float32)  # column biases broadcast on lanes
    b2c = b2.reshape(H2, 1).astype(jnp.float32)
    w3r = w3.reshape(1, H2).astype(jnp.float32)
    b3s = b3.reshape(1, 1).astype(jnp.float32)   # scalar, lives in SMEM

    out = pl.pallas_call(
        c_critic_kernel,
        out_shape=jax.ShapeDtypeStruct((1, B), jnp.float32),
        grid_spec=pltpu.PrefetchScalarGridSpec(
            num_scalar_prefetch=0,
            grid=grid,
            in_specs=[
                pl.BlockSpec((D, tile), lambda i: (0, i)),    # x^T batch tile
                # Grid-invariant operands: constant index_maps -> fetched once.
                pl.BlockSpec((H1, D), lambda i: (0, 0)),      # W1 [out, in]
                pl.BlockSpec((H1, 1), lambda i: (0, 0)),      # b1 column
                pl.BlockSpec((H2, H1), lambda i: (0, 0)),     # W2 [out, in]
                pl.BlockSpec((H2, 1), lambda i: (0, 0)),      # b2 column
                pl.BlockSpec((1, H2), lambda i: (0, 0)),      # W3 row
                pl.BlockSpec(memory_space=pltpu.MemorySpace.SMEM),  # b3 scalar
            ],
            # Lane-dense output row; ragged last block handled by Pallas
            # (out-of-range lanes are discarded).
            out_specs=pl.BlockSpec((1, tile), lambda i: (0, i)),
        ),
        compiler_params=pltpu.CompilerParams(
            # Parallel batch axis: v7x can shard tiles across its 2 TensorCores;
            # neutral on v5e/v6e.
            dimension_semantics=("parallel",),
        ),
    )(x_t, w1, b1c, w2, b2c, w3r, b3s)

    # torch.squeeze(..., -1)
    return out[0]


def init_params(key, obs_dim, act_dim, hidden_sizes):
    """Deterministic synthetic init; torch layout: W is [out, in], b is [out]."""
    sizes = [obs_dim + act_dim] + list(hidden_sizes) + [1]
    params = []
    for j in range(len(sizes) - 1):
        key, kw, kb = jax.random.split(key, 3)
        fan_in = sizes[j]
        bound = 1.0 / float(fan_in) ** 0.5
        w = jax.random.uniform(kw, (sizes[j + 1], sizes[j]),
                               minval=-bound, maxval=bound, dtype=jnp.float32)
        b = jax.random.uniform(kb, (sizes[j + 1],),
                               minval=-bound, maxval=bound, dtype=jnp.float32)
        params += [w, b]
    return tuple(params)


def reference_forward(obs_act, params):
    """Pure-JAX f32 reference (torch Linear: y = x @ W.T + b)."""
    w1, b1, w2, b2, w3, b3 = params
    h1 = jnp.maximum(obs_act @ w1.T + b1, 0.0)
    h2 = jnp.maximum(h1 @ w2.T + b2, 0.0)
    z = h2 @ w3.T + b3
    return jnp.squeeze(_softplus(z), axis=-1)


if __name__ == "__main__":
    # Shapes consistent with the module: obs_dim=8, act_dim=4, hidden=(32, 32).
    obs_dim, act_dim = 8, 4
    hidden_sizes = (32, 32)

    key = jax.random.PRNGKey(0)
    key, kdata = jax.random.split(key)
    params = init_params(key, obs_dim, act_dim, hidden_sizes)

    # batch=16  -> single full-batch block (block dim == array dim path)
    # batch=300 -> 2 grid steps with a ragged last block (Pallas-masked tail)
    for batch in (16, 300):
        kx = jax.random.fold_in(kdata, batch)
        obs_act = jax.random.normal(kx, (batch, obs_dim + act_dim),
                                    dtype=jnp.float32)
        ref = reference_forward(obs_act, params)
        out = jax.block_until_ready(c_critic_forward(obs_act, params))
        assert out.shape == (batch,), out.shape
        assert jnp.allclose(out, ref, atol=1e-5, rtol=1e-5), (batch, out, ref)

    print("KERNEL_OK")
</pallas_src>

<mosaic_0001>
module attributes {stable_mosaic.version = 11 : i64} {
  func.func @c_critic_kernel(%arg0: i32, %arg1: memref<12x16xf32, #tpu.memory_space<vmem>>, %arg2: memref<32x12xf32, #tpu.memory_space<vmem>>, %arg3: memref<32x1xf32, #tpu.memory_space<vmem>>, %arg4: memref<32x32xf32, #tpu.memory_space<vmem>>, %arg5: memref<32x1xf32, #tpu.memory_space<vmem>>, %arg6: memref<1x32xf32, #tpu.memory_space<vmem>>, %arg7: memref<1x1xf32, #tpu.memory_space<smem>>, %arg8: memref<1x16xf32, #tpu.memory_space<vmem>>) attributes {dimension_semantics = [#tpu.dimension_semantics<parallel>], iteration_bounds = array<i64: 1>, scalar_prefetch = 0 : i64, scratch_operands = 0 : i64, tpu.core_type = #tpu.core_type<tc>, window_params = [{transform_indices = @transform_0, window_bounds = array<i64: 12, 16>}, {pipeline_mode = #tpu.pipeline_mode<synchronous>, transform_indices = @transform_1, window_bounds = array<i64: 32, 12>}, {pipeline_mode = #tpu.pipeline_mode<synchronous>, transform_indices = @transform_2, window_bounds = array<i64: 32, 1>}, {pipeline_mode = #tpu.pipeline_mode<synchronous>, transform_indices = @transform_3, window_bounds = array<i64: 32, 32>}, {pipeline_mode = #tpu.pipeline_mode<synchronous>, transform_indices = @transform_4, window_bounds = array<i64: 32, 1>}, {pipeline_mode = #tpu.pipeline_mode<synchronous>, transform_indices = @transform_5, window_bounds = array<i64: 1, 32>}, {transform_indices = @transform_6, window_bounds = array<i64: 1, 1>}, {transform_indices = @transform_7, window_bounds = array<i64: 1, 16>}]} {
    %c0 = arith.constant 0 : index
    %c0_0 = arith.constant 0 : index
    %0 = vector.load %arg1[%c0, %c0_0] : memref<12x16xf32, #tpu.memory_space<vmem>>, vector<12x16xf32>
    %c0_1 = arith.constant 0 : index
    %c0_2 = arith.constant 0 : index
    %1 = vector.load %arg2[%c0_1, %c0_2] : memref<32x12xf32, #tpu.memory_space<vmem>>, vector<32x12xf32>
    %cst = arith.constant dense<0.000000e+00> : vector<32x16xf32>
    %2 = tpu.matmul %1, %0, %cst {dimension_numbers = #tpu.dot_dimension_numbers<[1], [0], [0], [1], [0, 0, 1, 1], [], []>} : vector<32x12xf32>, vector<12x16xf32>, vector<32x16xf32> -> vector<32x16xf32>
    %c0_3 = arith.constant 0 : index
    %c0_4 = arith.constant 0 : index
    %3 = vector.load %arg3[%c0_3, %c0_4] : memref<32x1xf32, #tpu.memory_space<vmem>>, vector<32x1xf32>
    %4 = vector.broadcast %3 : vector<32x1xf32> to vector<32x16xf32>
    %5 = arith.addf %2, %4 : vector<32x16xf32>
    %cst_5 = arith.constant 0.000000e+00 : f32
    %6 = vector.broadcast %cst_5 : f32 to vector<32x16xf32>
    %7 = arith.maximumf %5, %6 : vector<32x16xf32>
    %c0_6 = arith.constant 0 : index
    %c0_7 = arith.constant 0 : index
    %8 = vector.load %arg4[%c0_6, %c0_7] : memref<32x32xf32, #tpu.memory_space<vmem>>, vector<32x32xf32>
    %cst_8 = arith.constant dense<0.000000e+00> : vector<32x16xf32>
    %9 = tpu.matmul %8, %7, %cst_8 {dimension_numbers = #tpu.dot_dimension_numbers<[1], [0], [0], [1], [0, 0, 1, 1], [], []>} : vector<32x32xf32>, vector<32x16xf32>, vector<32x16xf32> -> vector<32x16xf32>
    %c0_9 = arith.constant 0 : index
    %c0_10 = arith.constant 0 : index
    %10 = vector.load %arg5[%c0_9, %c0_10] : memref<32x1xf32, #tpu.memory_space<vmem>>, vector<32x1xf32>
    %11 = vector.broadcast %10 : vector<32x1xf32> to vector<32x16xf32>
    %12 = arith.addf %9, %11 : vector<32x16xf32>
    %cst_11 = arith.constant 0.000000e+00 : f32
    %13 = vector.broadcast %cst_11 : f32 to vector<32x16xf32>
    %14 = arith.maximumf %12, %13 : vector<32x16xf32>
    %c0_12 = arith.constant 0 : index
    %c0_13 = arith.constant 0 : index
    %15 = vector.load %arg6[%c0_12, %c0_13] : memref<1x32xf32, #tpu.memory_space<vmem>>, vector<1x32xf32>
    %cst_14 = arith.constant dense<0.000000e+00> : vector<1x16xf32>
    %16 = tpu.matmul %15, %14, %cst_14 {dimension_numbers = #tpu.dot_dimension_numbers<[1], [0], [0], [1], [0, 0, 1, 1], [], []>} : vector<1x32xf32>, vector<32x16xf32>, vector<1x16xf32> -> vector<1x16xf32>
    %c0_15 = arith.constant 0 : index
    %c0_16 = arith.constant 0 : index
    %17 = memref.load %arg7[%c0_15, %c0_16] : memref<1x1xf32, #tpu.memory_space<smem>>
    %18 = vector.broadcast %17 : f32 to vector<1x16xf32>
    %19 = arith.addf %16, %18 : vector<1x16xf32>
    %cst_17 = arith.constant 2.000000e+01 : f32
    %20 = vector.broadcast %cst_17 : f32 to vector<1x16xf32>
    %21 = arith.cmpf ogt, %19, %20 : vector<1x16xf32>
    %cst_18 = arith.constant 2.000000e+01 : f32
    %22 = vector.broadcast %cst_18 : f32 to vector<1x16xf32>
    %23 = arith.minimumf %19, %22 : vector<1x16xf32>
    %24 = math.exp %23 : vector<1x16xf32>
    %25 = math.log1p %24 : vector<1x16xf32>
    %26 = arith.select %21, %19, %25 : vector<1x16xi1>, vector<1x16xf32>
    %c0_19 = arith.constant 0 : index
    %c0_20 = arith.constant 0 : index
    %27 = vector.load %arg8[%c0_19, %c0_20] : memref<1x16xf32, #tpu.memory_space<vmem>>, vector<1x16xf32>
    tpu.vector_store %arg8[%c0_19, %c0_20], %26 {strides = array<i32>} : memref<1x16xf32, #tpu.memory_space<vmem>>, vector<1x16xf32>,
    return
  }
  func.func @transform_0(%arg0: i32) -> (i32, i32) {
    %c0_i32 = arith.constant 0 : i32
    %c0_i32_0 = arith.constant 0 : i32
    return %c0_i32, %arg0 : i32, i32
  }
  func.func @transform_1(%arg0: i32) -> (i32, i32) {
    %c0_i32 = arith.constant 0 : i32
    %c0_i32_0 = arith.constant 0 : i32
    %c0_i32_1 = arith.constant 0 : i32
    return %c0_i32, %c0_i32_0 : i32, i32
  }
  func.func @transform_2(%arg0: i32) -> (i32, i32) {
    %c0_i32 = arith.constant 0 : i32
    %c0_i32_0 = arith.constant 0 : i32
    %c0_i32_1 = arith.constant 0 : i32
    return %c0_i32, %c0_i32_0 : i32, i32
  }
  func.func @transform_3(%arg0: i32) -> (i32, i32) {
    %c0_i32 = arith.constant 0 : i32
    %c0_i32_0 = arith.constant 0 : i32
    %c0_i32_1 = arith.constant 0 : i32
    return %c0_i32, %c0_i32_0 : i32, i32
  }
  func.func @transform_4(%arg0: i32) -> (i32, i32) {
    %c0_i32 = arith.constant 0 : i32
    %c0_i32_0 = arith.constant 0 : i32
    %c0_i32_1 = arith.constant 0 : i32
    return %c0_i32, %c0_i32_0 : i32, i32
  }
  func.func @transform_5(%arg0: i32) -> (i32, i32) {
    %c0_i32 = arith.constant 0 : i32
    %c0_i32_0 = arith.constant 0 : i32
    %c0_i32_1 = arith.constant 0 : i32
    return %c0_i32, %c0_i32_0 : i32, i32
  }
  func.func @transform_6(%arg0: i32) -> (i32, i32) {
    %c0_i32 = arith.constant 0 : i32
    %c0_i32_0 = arith.constant 0 : i32
    %c0_i32_1 = arith.constant 0 : i32
    return %c0_i32, %c0_i32_0 : i32, i32
  }
  func.func @transform_7(%arg0: i32) -> (i32, i32) {
    %c0_i32 = arith.constant 0 : i32
    %c0_i32_0 = arith.constant 0 : i32
    return %c0_i32, %arg0 : i32, i32
  }
}

</mosaic_0001>

<llo_original>
// kernel: c_critic_forward.1
$region0: #{c_critic_forward.1}
  #allocation0 [shape = 'u32[]', space=smem, size = 0x4, offset = 0x4, fixed_abs, tag = 'smem constant byte address 0x4 - core index']
  #allocation1 [shape = 'u32[144,128]{1,0:T(1,128)}', space=vmem, size = 0x12000, scoped, tag = 'internal scratch']
  #allocation2 [shape = 'f32[1,1]{1,0:T(1,128)S(6)}', space=smem, size = 0x200, scoped, tag = 'scoped memory for c_critic_forward.1']
  %s0 = inlined_call_operand.vmem [shape: f32[12,16], index: 0, kind: input, shape index: {}]
  %s1 = inlined_call_operand.vmem [shape: f32[32,12], index: 1, kind: input, shape index: {}]
  %s2 = inlined_call_operand.vmem [shape: f32[32,1], index: 2, kind: input, shape index: {}]
  %s3 = inlined_call_operand.vmem [shape: f32[32,32], index: 3, kind: input, shape index: {}]
  %s4 = inlined_call_operand.vmem [shape: f32[32,1], index: 4, kind: input, shape index: {}]
  %s5 = inlined_call_operand.vmem [shape: f32[1,32], index: 5, kind: input, shape index: {}]
  %s6 = inlined_call_operand.<no memory space> [shape: f32[1,1], index: 6, kind: input, shape index: {}]
  %s7 = inlined_call_operand.hbm [shape: f32[1,16], index: 7, kind: output, shape index: {}]
  %s8 = sld [smem:[#allocation0]]
  $region38: #{c_critic_forward.1} parent=0
    _
  %s10 = ssub.s32 1, %s8
  %s11 = scalar_select 0, %s10, %s8
  %12 = sst [smem:[#allocation2]] %s6
  $region1: #{c_critic_forward.1} parent=0
    #allocation3 [shape = 'u8[512]{0}', space=vmem, size = 0x400, scoped, tag = 'output window, operand 0, single buffered']
    #allocation4 [shape = 's32[1]{0}', space=sflag, size = 0x4, scoped, tag = 'scoped memory for c_critic_forward.1']
    %13 = vsyncpa [#allocation4], 0
    // Predicated region
    $region2: #{c_critic_forward.1} parent=1 // pred_check
      _
    $region3: #{c_critic_forward.1} parent=1 // pred_check_branch
      %15 = sbr.rel (0) target = $region5
    $region4: #{c_critic_forward.1} parent=1 // pred_region
      _
    $region5: #{c_critic_forward.1} parent=1 // pred_fallthru
      _
    // Predicated region
    $region6: #{c_critic_forward.1} parent=1 // pred_check
      _
    $region7: #{c_critic_forward.1} parent=1 // pred_check_branch
      %17 = sbr.rel (0) target = $region9
    $region8: #{c_critic_forward.1} parent=1 // pred_region
      _
    $region9: #{c_critic_forward.1} parent=1 // pred_fallthru
      _
    // Predicated region
    $region10: #{c_critic_forward.1} parent=1 // pred_check
      _
    $region11: #{c_critic_forward.1} parent=1 // pred_check_branch
      %19 = sbr.rel (0) target = $region13
    $region12: #{c_critic_forward.1} parent=1 // pred_region
      _
    $region13: #{c_critic_forward.1} parent=1 // pred_fallthru
      _
    // Predicated region
    $region14: #{c_critic_forward.1} parent=1 // pred_check
      _
    $region15: #{c_critic_forward.1} parent=1 // pred_check_branch
      %21 = sbr.rel (0) target = $region17
    $region16: #{c_critic_forward.1} parent=1 // pred_region
      _
    $region17: #{c_critic_forward.1} parent=1 // pred_fallthru
      _
    // Predicated region
    $region18: #{c_critic_forward.1} parent=1 // pred_check
      _
    $region19: #{c_critic_forward.1} parent=1 // pred_check_branch
      %23 = sbr.rel (0) target = $region21
    $region20: #{c_critic_forward.1} parent=1 // pred_region
      _
    $region21: #{c_critic_forward.1} parent=1 // pred_fallthru
      _
    // Predicated region
    $region22: #{c_critic_forward.1} parent=1 // pred_check
      _
    $region23: #{c_critic_forward.1} parent=1 // pred_check_branch
      %25 = sbr.rel (0) target = $region25
    $region24: #{c_critic_forward.1} parent=1 // pred_region
      _
    $region25: #{c_critic_forward.1} parent=1 // pred_fallthru
      _
    // Predicated region
    $region26: #{c_critic_forward.1} parent=1 // pred_check
      _
    $region27: #{c_critic_forward.1} parent=1 // pred_check_branch
      %27 = sbr.rel (0) target = $region29
    $region28: #{c_critic_forward.1} parent=1 // pred_region
      _
    $region29: #{c_critic_forward.1} parent=1 // pred_fallthru
      _
    %v28 = vld [vmem:[%s0] sm:$0xff]
    %v29 = vld [vmem:[%s0 + $0x8] sm:$0xf]
    %v30 = vld [vmem:[%s1] sm:$0xff]
    %v31 = vld [vmem:[%s1 + $0x8] sm:$0xff]
    %v32 = vld [vmem:[%s1 + $0x10] sm:$0xff]
    %v33 = vld [vmem:[%s1 + $0x18] sm:$0xff]
    %v34 = vld [vmem:[%s2] sm:$0xff]
    %v35 = vld [vmem:[%s2 + $0x8] sm:$0xff]
    %v36 = vld [vmem:[%s2 + $0x10] sm:$0xff]
    %v37 = vld [vmem:[%s2 + $0x18] sm:$0xff]
    %39 = vset.pattern.permute.xlu0 0
    %40 = vperm.xlu0 %39, %v34
    %v41 = vpop.permute.xlu0 %40
    %44 = vset.pattern.permute.xlu0 0
    %45 = vperm.xlu0 %44, %v35
    %v46 = vpop.permute.xlu0 %45
    %49 = vset.pattern.permute.xlu0 0
    %50 = vperm.xlu0 %49, %v36
    %v51 = vpop.permute.xlu0 %50
    %54 = vset.pattern.permute.xlu0 0
    %55 = vperm.xlu0 %54, %v37
    %v56 = vpop.permute.xlu0 %55
    %vm58 = vcmask 97280
    %v60 = vsel %vm58, %v30, 0
    %v63 = vsel %vm58, %v31, 0
    %v66 = vsel %vm58, %v32, 0
    %v69 = vsel %vm58, %v33, 0
    %vm71 = vcmask 1043456
    %v73 = vsel %vm71, %v29, 0
    %75 = vmatprep.subr.mxu0 0.0
    %76 = vmatpush1.msra.mxu0 0.0
    %77 = vmatprep.subr.mxu0 0.0
    %78 = vmatpush1.msra.mxu0 0.0
    %79 = vmatprep.subr.mxu0 0.0
    %80 = vmatpush1.msra.mxu0 0.0
    %81 = vmatprep.subr.mxu0 0.0
    %82 = vmatpush1.msra.mxu0 0.0
    %83 = vmatprep.subr.mxu0 0.0
    %84 = vmatpush1.msra.mxu0 0.0
    %85 = vmatprep.subr.mxu0 0.0
    %86 = vmatpush1.msra.mxu0 0.0
    %87 = vmatprep.subr.mxu0 0.0
    %88 = vmatpush1.msra.mxu0 0.0
    %89 = vmatprep.subr.mxu0 0.0
    %90 = vmatpush1.msra.mxu0 0.0
    %91 = vmatprep.subr.mxu0 0.0
    %92 = vmatpush1.msra.mxu0 0.0
    %93 = vmatprep.subr.mxu0 0.0
    %94 = vmatpush1.msra.mxu0 0.0
    %95 = vmatprep.subr.mxu0 0.0
    %96 = vmatpush1.msra.mxu0 0.0
    %97 = vmatprep.subr.mxu0 0.0
    %98 = vmatpush1.msra.mxu0 0.0
    %99 = vmatprep.subr.mxu0 0.0
    %100 = vmatpush1.msra.mxu0 0.0
    %101 = vmatprep.subr.mxu0 0.0
    %102 = vmatpush1.msra.mxu0 0.0
    %103 = vmatprep.subr.mxu0 0.0
    %104 = vmatpush1.msra.mxu0 %v73
    %105 = vmatprep.subr.mxu0 0.0
    %106 = vmatpush1.msra.mxu0 %v28
    %107 = vmatprep.subr.mxu0 0.0
    %108 = vmatpush2.msra.mxu0 0.0
    %109 = vmatprep.subr.mxu0 0.0
    %110 = vmatpush2.msra.mxu0 0.0
    %111 = vmatprep.subr.mxu0 0.0
    %112 = vmatpush2.msra.mxu0 0.0
    %113 = vmatprep.subr.mxu0 0.0
    %114 = vmatpush2.msra.mxu0 0.0
    %115 = vmatprep.subr.mxu0 0.0
    %116 = vmatpush2.msra.mxu0 0.0
    %117 = vmatprep.subr.mxu0 0.0
    %118 = vmatpush2.msra.mxu0 0.0
    %119 = vmatprep.subr.mxu0 0.0
    %120 = vmatpush2.msra.mxu0 0.0
    %121 = vmatprep.subr.mxu0 0.0
    %122 = vmatpush2.msra.mxu0 0.0
    %123 = vmatprep.subr.mxu0 0.0
    %124 = vmatpush2.msra.mxu0 0.0
    %125 = vmatprep.subr.mxu0 0.0
    %126 = vmatpush2.msra.mxu0 0.0
    %127 = vmatprep.subr.mxu0 0.0
    %128 = vmatpush2.msra.mxu0 0.0
    %129 = vmatprep.subr.mxu0 0.0
    %130 = vmatpush2.msra.mxu0 0.0
    %131 = vmatprep.subr.mxu0 0.0
    %132 = vmatpush2.msra.mxu0 0.0
    %133 = vmatprep.subr.mxu0 0.0
    %134 = vmatpush2.msra.mxu0 0.0
    %135 = vmatprep.subr.mxu0 0.0
    %136 = vmatpush2.msra.mxu0 0.0
    %137 = vmatprep.subr.mxu0 0.0
    %138 = vmatpush2.msra.mxu0 0.0
    %139 = vmatprep.mubr.f32.mxu0 0.0
    %140 = vmatmul.mubr.f32.gmra.mxu0 %v60
    %v141 = vpop.f32.mrf.mxu0
    %v142 = vadd.f32 %v41, %v141
    %v143 = vpop.f32.mrf.mxu0
    %144 = vmatprep.mubr.f32.mxu0 0.0
    %145 = vmatmul.mubr.f32.gmra.mxu0 %v63
    %v146 = vpop.f32.mrf.mxu0
    %v147 = vadd.f32 %v46, %v146
    %v148 = vpop.f32.mrf.mxu0
    %149 = vmatprep.mubr.f32.mxu0 0.0
    %150 = vmatmul.mubr.f32.gmra.mxu0 %v66
    %v151 = vpop.f32.mrf.mxu0
    %v152 = vadd.f32 %v51, %v151
    %v153 = vpop.f32.mrf.mxu0
    %154 = vmatprep.mubr.f32.mxu0 0.0
    %155 = vmatmul.mubr.f32.gmra.mxu0 %v69
    %v156 = vpop.f32.mrf.mxu0
    %v157 = vadd.f32 %v56, %v156
    %v158 = vpop.f32.mrf.mxu0
    %159 = vdwg.mxu0
    %v160 = vmax.f32 %v142, 0.0
    %v161 = vmax.f32 %v147, 0.0
    %v162 = vmax.f32 %v152, 0.0
    %v163 = vmax.f32 %v157, 0.0
    %v164 = vld [vmem:[%s3] sm:$0xff]
    %v165 = vld [vmem:[%s3 + $0x8] sm:$0xff]
    %v166 = vld [vmem:[%s3 + $0x10] sm:$0xff]
    %v167 = vld [vmem:[%s3 + $0x18] sm:$0xff]
    %v168 = vld [vmem:[%s4] sm:$0xff]
    %v169 = vld [vmem:[%s4 + $0x8] sm:$0xff]
    %v170 = vld [vmem:[%s4 + $0x10] sm:$0xff]
    %v171 = vld [vmem:[%s4 + $0x18] sm:$0xff]
    %173 = vset.pattern.permute.xlu0 0
    %174 = vperm.xlu0 %173, %v168
    %v175 = vpop.permute.xlu0 %174
    %178 = vset.pattern.permute.xlu0 0
    %179 = vperm.xlu0 %178, %v169
    %v180 = vpop.permute.xlu0 %179
    %183 = vset.pattern.permute.xlu0 0
    %184 = vperm.xlu0 %183, %v170
    %v185 = vpop.permute.xlu0 %184
    %188 = vset.pattern.permute.xlu0 0
    %189 = vperm.xlu0 %188, %v171
    %v190 = vpop.permute.xlu0 %189
    %vm192 = vcmask 261120
    %v194 = vsel %vm192, %v164, 0
    %v197 = vsel %vm192, %v165, 0
    %v200 = vsel %vm192, %v166, 0
    %v203 = vsel %vm192, %v167, 0
    %205 = vmatprep.subr.mxu0 0.0
    %206 = vmatpush1.msra.mxu0 0.0
    %207 = vmatprep.subr.mxu0 0.0
    %208 = vmatpush1.msra.mxu0 0.0
    %209 = vmatprep.subr.mxu0 0.0
    %210 = vmatpush1.msra.mxu0 0.0
    %211 = vmatprep.subr.mxu0 0.0
    %212 = vmatpush1.msra.mxu0 0.0
    %213 = vmatprep.subr.mxu0 0.0
    %214 = vmatpush1.msra.mxu0 0.0
    %215 = vmatprep.subr.mxu0 0.0
    %216 = vmatpush1.msra.mxu0 0.0
    %217 = vmatprep.subr.mxu0 0.0
    %218 = vmatpush1.msra.mxu0 0.0
    %219 = vmatprep.subr.mxu0 0.0
    %220 = vmatpush1.msra.mxu0 0.0
    %221 = vmatprep.subr.mxu0 0.0
    %222 = vmatpush1.msra.mxu0 0.0
    %223 = vmatprep.subr.mxu0 0.0
    %224 = vmatpush1.msra.mxu0 0.0
    %225 = vmatprep.subr.mxu0 0.0
    %226 = vmatpush1.msra.mxu0 0.0
    %227 = vmatprep.subr.mxu0 0.0
    %228 = vmatpush1.msra.mxu0 0.0
    %229 = vmatprep.subr.mxu0 0.0
    %230 = vmatpush1.msra.mxu0 %v163
    %231 = vmatprep.subr.mxu0 0.0
    %232 = vmatpush1.msra.mxu0 %v162
    %233 = vmatprep.subr.mxu0 0.0
    %234 = vmatpush1.msra.mxu0 %v161
    %235 = vmatprep.subr.mxu0 0.0
    %236 = vmatpush1.msra.mxu0 %v160
    %237 = vmatprep.subr.mxu0 0.0
    %238 = vmatpush2.msra.mxu0 0.0
    %239 = vmatprep.subr.mxu0 0.0
    %240 = vmatpush2.msra.mxu0 0.0
    %241 = vmatprep.subr.mxu0 0.0
    %242 = vmatpush2.msra.mxu0 0.0
    %243 = vmatprep.subr.mxu0 0.0
    %244 = vmatpush2.msra.mxu0 0.0
    %245 = vmatprep.subr.mxu0 0.0
    %246 = vmatpush2.msra.mxu0 0.0
    %247 = vmatprep.subr.mxu0 0.0
    %248 = vmatpush2.msra.mxu0 0.0
    %249 = vmatprep.subr.mxu0 0.0
    %250 = vmatpush2.msra.mxu0 0.0
    %251 = vmatprep.subr.mxu0 0.0
    %252 = vmatpush2.msra.mxu0 0.0
    %253 = vmatprep.subr.mxu0 0.0
    %254 = vmatpush2.msra.mxu0 0.0
    %255 = vmatprep.subr.mxu0 0.0
    %256 = vmatpush2.msra.mxu0 0.0
    %257 = vmatprep.subr.mxu0 0.0
    %258 = vmatpush2.msra.mxu0 0.0
    %259 = vmatprep.subr.mxu0 0.0
    %260 = vmatpush2.msra.mxu0 0.0
    %261 = vmatprep.subr.mxu0 0.0
    %262 = vmatpush2.msra.mxu0 0.0
    %263 = vmatprep.subr.mxu0 0.0
    %264 = vmatpush2.msra.mxu0 0.0
    %265 = vmatprep.subr.mxu0 0.0
    %266 = vmatpush2.msra.mxu0 0.0
    %267 = vmatprep.subr.mxu0 0.0
    %268 = vmatpush2.msra.mxu0 0.0
    %269 = vmatprep.mubr.f32.mxu0 0.0
    %270 = vmatmul.mubr.f32.gmra.mxu0 %v194
    %v271 = vpop.f32.mrf.mxu0
    %v272 = vadd.f32 %v175, %v271
    %v273 = vpop.f32.mrf.mxu0
    %274 = vmatprep.mubr.f32.mxu0 0.0
    %275 = vmatmul.mubr.f32.gmra.mxu0 %v197
    %v276 = vpop.f32.mrf.mxu0
    %v277 = vadd.f32 %v180, %v276
    %v278 = vpop.f32.mrf.mxu0
    %279 = vmatprep.mubr.f32.mxu0 0.0
    %280 = vmatmul.mubr.f32.gmra.mxu0 %v200
    %v281 = vpop.f32.mrf.mxu0
    %v282 = vadd.f32 %v185, %v281
    %v283 = vpop.f32.mrf.mxu0
    %284 = vmatprep.mubr.f32.mxu0 0.0
    %285 = vmatmul.mubr.f32.gmra.mxu0 %v203
    %v286 = vpop.f32.mrf.mxu0
    %v287 = vadd.f32 %v190, %v286
    %v288 = vpop.f32.mrf.mxu0
    %289 = vdwg.mxu0
    %v290 = vmax.f32 %v272, 0.0
    %v291 = vmax.f32 %v277, 0.0
    %v292 = vmax.f32 %v282, 0.0
    %v293 = vmax.f32 %v287, 0.0
    %v294 = vld [vmem:[%s5] sm:$0x1]
    %s295 = sld [smem:[#allocation2]]
    %v296 = vstv %s295
    %v298 = vsel %vm192, %v294, 0
    %300 = vmatprep.subr.mxu0 0.0
    %301 = vmatpush1.msra.mxu0 0.0
    %302 = vmatprep.subr.mxu0 0.0
    %303 = vmatpush1.msra.mxu0 0.0
    %304 = vmatprep.subr.mxu0 0.0
    %305 = vmatpush1.msra.mxu0 0.0
    %306 = vmatprep.subr.mxu0 0.0
    %307 = vmatpush1.msra.mxu0 0.0
    %308 = vmatprep.subr.mxu0 0.0
    %309 = vmatpush1.msra.mxu0 0.0
    %310 = vmatprep.subr.mxu0 0.0
    %311 = vmatpush1.msra.mxu0 0.0
    %312 = vmatprep.subr.mxu0 0.0
    %313 = vmatpush1.msra.mxu0 0.0
    %314 = vmatprep.subr.mxu0 0.0
    %315 = vmatpush1.msra.mxu0 0.0
    %316 = vmatprep.subr.mxu0 0.0
    %317 = vmatpush1.msra.mxu0 0.0
    %318 = vmatprep.subr.mxu0 0.0
    %319 = vmatpush1.msra.mxu0 0.0
    %320 = vmatprep.subr.mxu0 0.0
    %321 = vmatpush1.msra.mxu0 0.0
    %322 = vmatprep.subr.mxu0 0.0
    %323 = vmatpush1.msra.mxu0 0.0
    %324 = vmatprep.subr.mxu0 0.0
    %325 = vmatpush1.msra.mxu0 %v293
    %326 = vmatprep.subr.mxu0 0.0
    %327 = vmatpush1.msra.mxu0 %v292
    %328 = vmatprep.subr.mxu0 0.0
    %329 = vmatpush1.msra.mxu0 %v291
    %330 = vmatprep.subr.mxu0 0.0
    %331 = vmatpush1.msra.mxu0 %v290
    %332 = vmatprep.subr.mxu0 0.0
    %333 = vmatpush2.msra.mxu0 0.0
    %334 = vmatprep.subr.mxu0 0.0
    %335 = vmatpush2.msra.mxu0 0.0
    %336 = vmatprep.subr.mxu0 0.0
    %337 = vmatpush2.msra.mxu0 0.0
    %338 = vmatprep.subr.mxu0 0.0
    %339 = vmatpush2.msra.mxu0 0.0
    %340 = vmatprep.subr.mxu0 0.0
    %341 = vmatpush2.msra.mxu0 0.0
    %342 = vmatprep.subr.mxu0 0.0
    %343 = vmatpush2.msra.mxu0 0.0
    %344 = vmatprep.subr.mxu0 0.0
    %345 = vmatpush2.msra.mxu0 0.0
    %346 = vmatprep.subr.mxu0 0.0
    %347 = vmatpush2.msra.mxu0 0.0
    %348 = vmatprep.subr.mxu0 0.0
    %349 = vmatpush2.msra.mxu0 0.0
    %350 = vmatprep.subr.mxu0 0.0
    %351 = vmatpush2.msra.mxu0 0.0
    %352 = vmatprep.subr.mxu0 0.0
    %353 = vmatpush2.msra.mxu0 0.0
    %354 = vmatprep.subr.mxu0 0.0
    %355 = vmatpush2.msra.mxu0 0.0
    %356 = vmatprep.subr.mxu0 0.0
    %357 = vmatpush2.msra.mxu0 0.0
    %358 = vmatprep.subr.mxu0 0.0
    %359 = vmatpush2.msra.mxu0 0.0
    %360 = vmatprep.subr.mxu0 0.0
    %361 = vmatpush2.msra.mxu0 0.0
    %362 = vmatprep.subr.mxu0 0.0
    %363 = vmatpush2.msra.mxu0 0.0
    %364 = vmatprep.mubr.f32.mxu0 0.0
    %365 = vmatmul.mubr.f32.gmra.mxu0 %v298
    %v366 = vpop.f32.mrf.mxu0
    %v367 = vadd.f32 %v296, %v366
    %v368 = vpop.f32.mrf.mxu0
    %369 = vdwg.mxu0
    %vm370 = vcmp.gt.f32.partialorder %v367, 20.0
    %v371 = vmin.f32 %v367, 20.0
    %v372 = vmul.f32 %v371, 1.442695
    %v373 = vpow.pop %v372
    %v374 = vadd.f32 %v373, 1.0
    %v375 = vlog2.pop %v374
    %v376 = vmul.f32 %v375, 0.6931472
    %v377 = vmul.f32 -0.5, %v373
    %v378 = vadd.f32 %v377, 1.0
    %v379 = vmul.f32 %v378, %v373
    %v380 = vand.u32 2147483647, %v373
    %vm381 = vcmp.lt.f32.partialorder %v380, 0.0004427343
    %v382 = vsel %vm381, %v379, %v376
    %v383 = vsel %vm370, %v367, %v382
    %vm384 = vcmask 122880
    %385 = vst.msk [vmem:[#allocation3] sm:$0x1] %vm384, %v383
    // Predicated region
    $region30: #{c_critic_forward.1} parent=1 // pred_check
      _
    $region31: #{c_critic_forward.1} parent=1 // pred_check_branch
      %387 = sbr.rel (0) target = $region33
    $region32: #{c_critic_forward.1} parent=1 // pred_region
      %s389 = ssub.s32 16, 16
      %390 = vsyncadd [#allocation4], %s389
      %s392 = sshll.u32 [#allocation3], 4
      %s393 = int_to_ptr.vmem [resolvable:$true] %s392
      %395 = dma.vmem_to_hbm [thread:$0]  %s393, 16, %s7, [#allocation4]
    $region33: #{c_critic_forward.1} parent=1 // pred_fallthru
      _
    // Predicated region
    $region34: #{c_critic_forward.1} parent=1 // pred_check
      _
    $region35: #{c_critic_forward.1} parent=1 // pred_check_branch
      %397 = sbr.rel (0) target = $region37
    $region36: #{c_critic_forward.1} parent=1 // pred_region
      %398 = dma.done [#allocation4], 16
    $region37: #{c_critic_forward.1} parent=1 // pred_fallthru
      _
    %399 = vsyncpa [#allocation4], 1

</llo_original>
